<compile_context>
chip_gen: v5e
topology: v5e:2x2
jax: 0.10.0
libtpu: 0.0.40
codegen_flags: <defaults>
</compile_context>

<pallas_src>
import numpy as np
import jax
import jax.numpy as jnp
from jax.experimental import pallas as pl
from jax.experimental.pallas import tpu as pltpu

d_k = d_v = 64
_SCALE = 1.0 / np.sqrt(d_k)   # == 0.125, exactly representable in bf16


def _sdpa_kernel(q_ref, k_ref, v_ref, mask_ref, ctx_ref, attn_ref):
    # q_ref: (G, Lq, d_k) bf16, k_ref: (G, Lk, d_k) bf16, v_ref: (G, Lk, d_v) bf16,
    # mask_ref: (G, Lq, Lk) int8 (nonzero => masked)
    q = q_ref[...] * _SCALE            # fold 1/sqrt(d_k) into Q (bf16, exact for 1/8)
    k = k_ref[...]
    v = v_ref[...]
    m = mask_ref[...]

    # scores = (Q / sqrt(d_k)) @ K^T  -- batched NT matmul, f32 accumulation on MXU
    scores = jnp.einsum("gqd,gkd->gqk", q, k,
                        preferred_element_type=jnp.float32)      # (G, Lq, Lk) f32

    # masked_fill_(attn_mask, -1e9)
    scores = jnp.where(m != 0, jnp.float32(-1e9), scores)

    # numerically stable softmax over the last dim, all in f32
    smax = jnp.max(scores, axis=-1, keepdims=True)
    p = jnp.exp(scores - smax)
    denom = jnp.sum(p, axis=-1, keepdims=True)
    attn = p * pl.reciprocal(denom, approx=True)                 # EUP vrcp

    # context = attn @ V  (bf16 operands, f32 accumulation)
    ctx = jnp.einsum("gqk,gkd->gqd", attn.astype(v.dtype), v,
                     preferred_element_type=jnp.float32)         # (G, Lq, d_v) f32

    attn_ref[...] = attn.astype(attn_ref.dtype)
    ctx_ref[...] = ctx.astype(ctx_ref.dtype)


def _heads_per_step(BH, Lq, Lk, dk, dv, budget_bytes=4 << 20):
    """Largest divisor of BH whose per-step working set fits a conservative VMEM
    budget (safe even for v7x's 64 MiB physical / 32 MiB default-scoped VMEM)."""
    per_head = (
        2 * (Lq * dk * 2 + Lk * dk * 2 + Lk * dv * 2   # bf16 inputs, double-buffered
             + Lq * Lk * 1                              # int8 mask, double-buffered
             + Lq * dv * 4 + Lq * Lk * 4)               # f32 outputs, double-buffered
        + 4 * Lq * Lk * 4 + Lq * dv * 4                 # in-kernel f32 intermediates
    )
    g = int(max(1, min(BH, budget_bytes // max(per_head, 1))))
    while BH % g:
        g -= 1
    return g


def scaled_dot_product_attention(Q, K, V, attn_mask):
    """Q: [B,H,Lq,d_k], K: [B,H,Lk,d_k], V: [B,H,Lk,d_v], attn_mask: [B,H,Lq,Lk] bool
    (True = masked). Returns (context [B,H,Lq,d_v], attn [B,H,Lq,Lk]) in float32."""
    B, H, Lq, dk = Q.shape
    Lk = K.shape[2]
    dv = V.shape[3]
    BH = B * H

    # bf16 operands for the MXU (f32 accumulation happens in-kernel); int8 mask.
    q = Q.reshape(BH, Lq, dk).astype(jnp.bfloat16)
    k = K.reshape(BH, Lk, dk).astype(jnp.bfloat16)
    v = V.reshape(BH, Lk, dv).astype(jnp.bfloat16)
    m = attn_mask.reshape(BH, Lq, Lk).astype(jnp.int8)

    G = _heads_per_step(BH, Lq, Lk, dk, dv)
    grid = (BH // G,)

    ctx, attn = pl.pallas_call(
        _sdpa_kernel,
        out_shape=(
            jax.ShapeDtypeStruct((BH, Lq, dv), jnp.float32),
            jax.ShapeDtypeStruct((BH, Lq, Lk), jnp.float32),
        ),
        grid_spec=pltpu.PrefetchScalarGridSpec(
            num_scalar_prefetch=0,
            grid=grid,
            in_specs=[
                pl.BlockSpec((G, Lq, dk), lambda i: (i, 0, 0)),
                pl.BlockSpec((G, Lk, dk), lambda i: (i, 0, 0)),
                pl.BlockSpec((G, Lk, dv), lambda i: (i, 0, 0)),
                pl.BlockSpec((G, Lq, Lk), lambda i: (i, 0, 0)),
            ],
            out_specs=(
                pl.BlockSpec((G, Lq, dv), lambda i: (i, 0, 0)),
                pl.BlockSpec((G, Lq, Lk), lambda i: (i, 0, 0)),
            ),
        ),
        compiler_params=pltpu.CompilerParams(
            dimension_semantics=("parallel",)),   # megacore-shardable on v7x
    )(q, k, v, m)

    return ctx.reshape(B, H, Lq, dv), attn.reshape(B, H, Lq, Lk)


def _reference(Q, K, V, attn_mask):
    scores = jnp.einsum("bhqd,bhkd->bhqk", Q, K) / np.sqrt(d_k)
    scores = jnp.where(attn_mask, -1e9, scores)
    attn = jax.nn.softmax(scores, axis=-1)
    ctx = jnp.einsum("bhqk,bhkd->bhqd", attn, V)
    return ctx, attn


if __name__ == "__main__":
    key = jax.random.PRNGKey(0)
    B, H, Lq, Lk = 2, 2, 8, 8
    kq, kk, kv = jax.random.split(key, 3)

    Q = jax.random.normal(kq, (B, H, Lq, d_k), dtype=jnp.float32)
    K = jax.random.normal(kk, (B, H, Lk, d_k), dtype=jnp.float32)
    V = jax.random.normal(kv, (B, H, Lk, d_v), dtype=jnp.float32)
    # pad-style mask: mask out last 2 key positions for every query
    attn_mask = jnp.broadcast_to(
        (jnp.arange(Lk) >= Lk - 2)[None, None, None, :], (B, H, Lq, Lk))

    ctx, attn = scaled_dot_product_attention(Q, K, V, attn_mask)
    jax.block_until_ready((ctx, attn))

    ctx_ref, attn_ref = _reference(Q, K, V, attn_mask)
    # bf16 matmul operands (f32 accumulation) -> loosened tolerance vs f32 reference.
    np.testing.assert_allclose(np.asarray(ctx), np.asarray(ctx_ref), rtol=5e-2, atol=1e-2)
    np.testing.assert_allclose(np.asarray(attn), np.asarray(attn_ref), rtol=5e-2, atol=1e-2)

    print("KERNEL_OK")
</pallas_src>

<mosaic_0001>
module attributes {stable_mosaic.version = 11 : i64} {
  func.func @_sdpa_kernel(%arg0: i32, %arg1: memref<4x8x64xbf16, #tpu.memory_space<vmem>>, %arg2: memref<4x8x64xbf16, #tpu.memory_space<vmem>>, %arg3: memref<4x8x64xbf16, #tpu.memory_space<vmem>>, %arg4: memref<4x8x8xi8, #tpu.memory_space<vmem>>, %arg5: memref<4x8x64xf32, #tpu.memory_space<vmem>>, %arg6: memref<4x8x8xf32, #tpu.memory_space<vmem>>) attributes {dimension_semantics = [#tpu.dimension_semantics<parallel>], iteration_bounds = array<i64: 1>, scalar_prefetch = 0 : i64, scratch_operands = 0 : i64, tpu.core_type = #tpu.core_type<tc>, window_params = [{transform_indices = @transform_0, window_bounds = array<i64: 4, 8, 64>}, {transform_indices = @transform_1, window_bounds = array<i64: 4, 8, 64>}, {transform_indices = @transform_2, window_bounds = array<i64: 4, 8, 64>}, {transform_indices = @transform_3, window_bounds = array<i64: 4, 8, 8>}, {transform_indices = @transform_4, window_bounds = array<i64: 4, 8, 64>}, {transform_indices = @transform_5, window_bounds = array<i64: 4, 8, 8>}]} {
    %c0 = arith.constant 0 : index
    %c0_0 = arith.constant 0 : index
    %c0_1 = arith.constant 0 : index
    %0 = vector.load %arg1[%c0, %c0_0, %c0_1] : memref<4x8x64xbf16, #tpu.memory_space<vmem>>, vector<4x8x64xbf16>
    %1 = arith.extf %0 : vector<4x8x64xbf16> to vector<4x8x64xf32>
    %cst = arith.constant 1.250000e-01 : f32
    %2 = vector.broadcast %cst : f32 to vector<4x8x64xf32>
    %3 = arith.mulf %1, %2 : vector<4x8x64xf32>
    %c0_2 = arith.constant 0 : index
    %c0_3 = arith.constant 0 : index
    %c0_4 = arith.constant 0 : index
    %4 = vector.load %arg2[%c0_2, %c0_3, %c0_4] : memref<4x8x64xbf16, #tpu.memory_space<vmem>>, vector<4x8x64xbf16>
    %c0_5 = arith.constant 0 : index
    %c0_6 = arith.constant 0 : index
    %c0_7 = arith.constant 0 : index
    %5 = vector.load %arg3[%c0_5, %c0_6, %c0_7] : memref<4x8x64xbf16, #tpu.memory_space<vmem>>, vector<4x8x64xbf16>
    %c0_8 = arith.constant 0 : index
    %c0_9 = arith.constant 0 : index
    %c0_10 = arith.constant 0 : index
    %6 = vector.load %arg4[%c0_8, %c0_9, %c0_10] : memref<4x8x8xi8, #tpu.memory_space<vmem>>, vector<4x8x8xi8>
    "tpu.trace_start"() <{level = 10 : i32, message = "gqd,gkd->gqk"}> : () -> ()
    %cst_11 = arith.constant dense<0.000000e+00> : vector<4x8x8xf32>
    %7 = tpu.matmul %3, %4, %cst_11 {dimension_numbers = #tpu.dot_dimension_numbers<[2], [2], [1], [1], [0, 0, 0, 1, 1, 1], [0], [0]>} : vector<4x8x64xf32>, vector<4x8x64xbf16>, vector<4x8x8xf32> -> vector<4x8x8xf32>
    %c0_i8 = arith.constant 0 : i8
    "tpu.trace_stop"() : () -> ()
    %8 = vector.broadcast %c0_i8 : i8 to vector<4x8x8xi8>
    %9 = arith.cmpi ne, %6, %8 : vector<4x8x8xi8>
    %cst_12 = arith.constant -1.000000e+09 : f32
    %10 = vector.broadcast %cst_12 : f32 to vector<4x8x8xf32>
    %11 = arith.select %9, %10, %7 : vector<4x8x8xi1>, vector<4x8x8xf32>
    %cst_13 = arith.constant dense<0xFF800000> : vector<4x8xf32>
    %12 = vector.multi_reduction <maximumf>, %11, %cst_13 [2] : vector<4x8x8xf32> to vector<4x8xf32>
    %13 = vector.shape_cast %12 : vector<4x8xf32> to vector<4x8x1xf32>
    %14 = vector.broadcast %13 : vector<4x8x1xf32> to vector<4x8x8xf32>
    %15 = arith.subf %11, %14 : vector<4x8x8xf32>
    %16 = math.exp %15 : vector<4x8x8xf32>
    %cst_14 = arith.constant dense<0.000000e+00> : vector<4x8xf32>
    %17 = vector.multi_reduction <add>, %16, %cst_14 [2] : vector<4x8x8xf32> to vector<4x8xf32>
    %18 = vector.shape_cast %17 : vector<4x8xf32> to vector<4x8x1xf32>
    %19 = tpu.reciprocal %18 {approx = true} : vector<4x8x1xf32> -> vector<4x8x1xf32>
    %20 = vector.broadcast %19 : vector<4x8x1xf32> to vector<4x8x8xf32>
    %21 = arith.mulf %16, %20 : vector<4x8x8xf32>
    %22 = arith.truncf %21 : vector<4x8x8xf32> to vector<4x8x8xbf16>
    "tpu.trace_start"() <{level = 10 : i32, message = "gqk,gkd->gqd"}> : () -> ()
    %cst_15 = arith.constant dense<0.000000e+00> : vector<4x8x64xf32>
    %23 = tpu.matmul %22, %5, %cst_15 {dimension_numbers = #tpu.dot_dimension_numbers<[2], [1], [1], [2], [0, 0, 0, 1, 1, 2], [0], [0]>} : vector<4x8x8xbf16>, vector<4x8x64xbf16>, vector<4x8x64xf32> -> vector<4x8x64xf32>
    "tpu.trace_stop"() : () -> ()
    %c0_16 = arith.constant 0 : index
    %c0_17 = arith.constant 0 : index
    %c0_18 = arith.constant 0 : index
    %24 = vector.load %arg6[%c0_16, %c0_17, %c0_18] : memref<4x8x8xf32, #tpu.memory_space<vmem>>, vector<4x8x8xf32>
    tpu.vector_store %arg6[%c0_16, %c0_17, %c0_18], %21 {strides = array<i32>} : memref<4x8x8xf32, #tpu.memory_space<vmem>>, vector<4x8x8xf32>,
    %c0_19 = arith.constant 0 : index
    %c0_20 = arith.constant 0 : index
    %c0_21 = arith.constant 0 : index
    %25 = vector.load %arg5[%c0_19, %c0_20, %c0_21] : memref<4x8x64xf32, #tpu.memory_space<vmem>>, vector<4x8x64xf32>
    tpu.vector_store %arg5[%c0_19, %c0_20, %c0_21], %23 {strides = array<i32>} : memref<4x8x64xf32, #tpu.memory_space<vmem>>, vector<4x8x64xf32>,
    return
  }
  func.func @transform_0(%arg0: i32) -> (i32, i32, i32) {
    %c0_i32 = arith.constant 0 : i32
    %c0_i32_0 = arith.constant 0 : i32
    %c0_i32_1 = arith.constant 0 : i32
    return %arg0, %c0_i32, %c0_i32_0 : i32, i32, i32
  }
  func.func @transform_1(%arg0: i32) -> (i32, i32, i32) {
    %c0_i32 = arith.constant 0 : i32
    %c0_i32_0 = arith.constant 0 : i32
    %c0_i32_1 = arith.constant 0 : i32
    return %arg0, %c0_i32, %c0_i32_0 : i32, i32, i32
  }
  func.func @transform_2(%arg0: i32) -> (i32, i32, i32) {
    %c0_i32 = arith.constant 0 : i32
    %c0_i32_0 = arith.constant 0 : i32
    %c0_i32_1 = arith.constant 0 : i32
    return %arg0, %c0_i32, %c0_i32_0 : i32, i32, i32
  }
  func.func @transform_3(%arg0: i32) -> (i32, i32, i32) {
    %c0_i32 = arith.constant 0 : i32
    %c0_i32_0 = arith.constant 0 : i32
    %c0_i32_1 = arith.constant 0 : i32
    return %arg0, %c0_i32, %c0_i32_0 : i32, i32, i32
  }
  func.func @transform_4(%arg0: i32) -> (i32, i32, i32) {
    %c0_i32 = arith.constant 0 : i32
    %c0_i32_0 = arith.constant 0 : i32
    %c0_i32_1 = arith.constant 0 : i32
    return %arg0, %c0_i32, %c0_i32_0 : i32, i32, i32
  }
  func.func @transform_5(%arg0: i32) -> (i32, i32, i32) {
    %c0_i32 = arith.constant 0 : i32
    %c0_i32_0 = arith.constant 0 : i32
    %c0_i32_1 = arith.constant 0 : i32
    return %arg0, %c0_i32, %c0_i32_0 : i32, i32, i32
  }
}

</mosaic_0001>

<llo_original>
// kernel: tpu_custom_call.1
$region0: #{tpu_custom_call.1}
  #allocation0 [shape = 'u32[]', space=smem, size = 0x4, offset = 0x4, fixed_abs, tag = 'smem constant byte address 0x4 - core index']
  #allocation1 [shape = 'u32[72,128]{1,0:T(1,128)}', space=vmem, size = 0x9000, scoped, tag = 'internal scratch']
  %s0 = inlined_call_operand.hbm [shape: bf16[4,8,64], index: 0, kind: input, shape index: {}]
  %s1 = inlined_call_operand.hbm [shape: bf16[4,8,64], index: 1, kind: input, shape index: {}]
  %s2 = inlined_call_operand.hbm [shape: bf16[4,8,64], index: 2, kind: input, shape index: {}]
  %s3 = inlined_call_operand.hbm [shape: s8[4,8,8], index: 3, kind: input, shape index: {}]
  %s4 = inlined_call_operand.hbm [shape: f32[4,8,64], index: 4, kind: output, shape index: {0}]
  %s5 = inlined_call_operand.hbm [shape: f32[4,8,8], index: 5, kind: output, shape index: {1}]
  %6 = xla_tuple %s4, %s5
  %s7 = sld [smem:[#allocation0]]
  $region50: #{tpu_custom_call.1} parent=0
    _
  %s9 = ssub.s32 1, %s7
  %s10 = scalar_select 0, %s9, %s7
  $region1: #{tpu_custom_call.1} parent=0
    #allocation2 [shape = 'u8[8192]{0}', space=vmem, size = 0x2000, scoped, tag = 'input window, operand 0, single buffered']
    #allocation3 [shape = 's32[1]{0}', space=sflag, size = 0x4, scoped, tag = 'scoped memory for tpu_custom_call.1']
    #allocation4 [shape = 's32[1]{0}', space=sflag, size = 0x4, scoped, tag = 'scoped memory for tpu_custom_call.1']
    #allocation5 [shape = 'u8[8192]{0}', space=vmem, size = 0x2000, scoped, tag = 'input window, operand 1, single buffered']
    #allocation6 [shape = 's32[1]{0}', space=sflag, size = 0x4, scoped, tag = 'scoped memory for tpu_custom_call.1']
    #allocation7 [shape = 'u8[8192]{0}', space=vmem, size = 0x2000, scoped, tag = 'input window, operand 2, single buffered']
    #allocation8 [shape = 'u8[4096]{0}', space=vmem, size = 0x1000, scoped, tag = 'input window, operand 3, single buffered']
    #allocation9 [shape = 's32[1]{0}', space=sflag, size = 0x4, scoped, tag = 'scoped memory for tpu_custom_call.1']
    #allocation10 [shape = 'u8[16384]{0}', space=vmem, size = 0x4000, scoped, tag = 'output window, operand 0, single buffered']
    #allocation11 [shape = 'u8[16384]{0}', space=vmem, size = 0x4000, scoped, tag = 'output window, operand 1, single buffered']
    #allocation12 [shape = 's32[1]{0}', space=sflag, size = 0x4, scoped, tag = 'scoped memory for tpu_custom_call.1']
    %11 = vsyncpa [#allocation3], 0
    %12 = vsyncpa [#allocation6], 0
    %13 = vsyncpa [#allocation9], 0
    %14 = vsyncpa [#allocation4], 0
    %15 = vsyncpa [#allocation12], 0
    // Predicated region
    $region2: #{tpu_custom_call.1} parent=1 // pred_check
      _
    $region3: #{tpu_custom_call.1} parent=1 // pred_check_branch
      %17 = sbr.rel (0) target = $region5
    $region4: #{tpu_custom_call.1} parent=1 // pred_region
      %19 = vsyncadd [#allocation3], 0
      %s20 = sshll.u32 %s0, 4
      %s21 = int_to_ptr.hbm [resolvable:$true] %s20
      %s22 = sshll.u32 [#allocation2], 4
      %s23 = int_to_ptr.vmem [resolvable:$true] %s22
      %28 = dma.hbm_to_vmem [thread:$0]  %s21, 256, %s23, [#allocation3], 64, 64, 4
    $region5: #{tpu_custom_call.1} parent=1 // pred_fallthru
      _
    // Predicated region
    $region6: #{tpu_custom_call.1} parent=1 // pred_check
      _
    $region7: #{tpu_custom_call.1} parent=1 // pred_check_branch
      %30 = sbr.rel (0) target = $region9
    $region8: #{tpu_custom_call.1} parent=1 // pred_region
      %32 = vsyncadd [#allocation6], 0
      %s33 = sshll.u32 %s1, 4
      %s34 = int_to_ptr.hbm [resolvable:$true] %s33
      %s35 = sshll.u32 [#allocation5], 4
      %s36 = int_to_ptr.vmem [resolvable:$true] %s35
      %41 = dma.hbm_to_vmem [thread:$0]  %s34, 256, %s36, [#allocation6], 64, 64, 4
    $region9: #{tpu_custom_call.1} parent=1 // pred_fallthru
      _
    // Predicated region
    $region10: #{tpu_custom_call.1} parent=1 // pred_check
      _
    $region11: #{tpu_custom_call.1} parent=1 // pred_check_branch
      %43 = sbr.rel (0) target = $region13
    $region12: #{tpu_custom_call.1} parent=1 // pred_region
      %45 = vsyncadd [#allocation6], 0
      %s46 = sshll.u32 %s2, 4
      %s47 = int_to_ptr.hbm [resolvable:$true] %s46
      %s48 = sshll.u32 [#allocation7], 4
      %s49 = int_to_ptr.vmem [resolvable:$true] %s48
      %54 = dma.hbm_to_vmem [thread:$0]  %s47, 256, %s49, [#allocation6], 64, 64, 4
    $region13: #{tpu_custom_call.1} parent=1 // pred_fallthru
      _
    // Predicated region
    $region14: #{tpu_custom_call.1} parent=1 // pred_check
      _
    $region15: #{tpu_custom_call.1} parent=1 // pred_check_branch
      %56 = sbr.rel (0) target = $region17
    $region16: #{tpu_custom_call.1} parent=1 // pred_region
      %58 = vsyncadd [#allocation9], 0
      %s59 = sshll.u32 %s3, 4
      %s60 = int_to_ptr.hbm [resolvable:$true] %s59
      %s61 = sshll.u32 [#allocation8], 4
      %s62 = int_to_ptr.vmem [resolvable:$true] %s61
      %67 = dma.hbm_to_vmem [thread:$0]  %s60, 128, %s62, [#allocation9], 32, 32, 2
    $region17: #{tpu_custom_call.1} parent=1 // pred_fallthru
      _
    // Predicated region
    $region18: #{tpu_custom_call.1} parent=1 // pred_check
      _
    $region19: #{tpu_custom_call.1} parent=1 // pred_check_branch
      %69 = sbr.rel (0) target = $region21
    $region20: #{tpu_custom_call.1} parent=1 // pred_region
      %71 = dma.done [#allocation3], 256
    $region21: #{tpu_custom_call.1} parent=1 // pred_fallthru
      _
    // Predicated region
    $region22: #{tpu_custom_call.1} parent=1 // pred_check
      _
    $region23: #{tpu_custom_call.1} parent=1 // pred_check_branch
      %73 = sbr.rel (0) target = $region25
    $region24: #{tpu_custom_call.1} parent=1 // pred_region
      %75 = dma.done [#allocation6], 256
    $region25: #{tpu_custom_call.1} parent=1 // pred_fallthru
      _
    // Predicated region
    $region26: #{tpu_custom_call.1} parent=1 // pred_check
      _
    $region27: #{tpu_custom_call.1} parent=1 // pred_check_branch
      %77 = sbr.rel (0) target = $region29
    $region28: #{tpu_custom_call.1} parent=1 // pred_region
      %79 = dma.done [#allocation6], 256
    $region29: #{tpu_custom_call.1} parent=1 // pred_fallthru
      _
    // Predicated region
    $region30: #{tpu_custom_call.1} parent=1 // pred_check
      _
    $region31: #{tpu_custom_call.1} parent=1 // pred_check_branch
      %81 = sbr.rel (0) target = $region33
    $region32: #{tpu_custom_call.1} parent=1 // pred_region
      %83 = dma.done [#allocation9], 128
    $region33: #{tpu_custom_call.1} parent=1 // pred_fallthru
      _
    %v87 = vld [vmem:[#allocation2] sm:$0xf]
    %v88 = vld [vmem:[#allocation2 + $0x4] sm:$0xf]
    %v89 = vld [vmem:[#allocation2 + $0x8] sm:$0xf]
    %v90 = vld [vmem:[#allocation2 + $0xc] sm:$0xf]
    %v91 = vunpack.c.l.bf16 %v87
    %v92 = vunpack.c.l.bf16 %v88
    %v93 = vunpack.c.l.bf16 %v89
    %v94 = vunpack.c.l.bf16 %v90
    %v95 = vmul.f32 %v91, 0.125
    %v96 = vmul.f32 %v92, 0.125
    %v97 = vmul.f32 %v93, 0.125
    %v98 = vmul.f32 %v94, 0.125
    %v99 = vld [vmem:[#allocation5] sm:$0xf]
    %v100 = vld [vmem:[#allocation5 + $0x4] sm:$0xf]
    %v101 = vld [vmem:[#allocation5 + $0x8] sm:$0xf]
    %v102 = vld [vmem:[#allocation5 + $0xc] sm:$0xf]
    %v103 = vld [vmem:[#allocation7] sm:$0xf]
    %v104 = vld [vmem:[#allocation7 + $0x4] sm:$0xf]
    %v105 = vld [vmem:[#allocation7 + $0x8] sm:$0xf]
    %v106 = vld [vmem:[#allocation7 + $0xc] sm:$0xf]
    %v107 = vld [vmem:[#allocation8] sm:$0x3]
    %v108 = vld [vmem:[#allocation8 + $0x2] sm:$0x3]
    %v109 = vld [vmem:[#allocation8 + $0x4] sm:$0x3]
    %v110 = vld [vmem:[#allocation8 + $0x6] sm:$0x3]
    %vm111 = vcmask 523264
    %v113 = vsel %vm111, %v95, 0
    %v116 = vsel %vm111, %v99, 0
    %118 = vmatpush.bf16.xpose.msra.mxu0 0
    %119 = vmatpush.bf16.xpose.msra.mxu0 0
    %120 = vmatpush.bf16.xpose.msra.mxu0 0
    %121 = vmatpush.bf16.xpose.msra.mxu0 0
    %122 = vmatpush.bf16.xpose.msra.mxu0 0
    %123 = vmatpush.bf16.xpose.msra.mxu0 0
    %124 = vmatpush.bf16.xpose.msra.mxu0 0
    %125 = vmatpush.bf16.xpose.msra.mxu0 %v116
    %126 = vmatmul.f32.gmra.mxu0 %v113
    %v127 = vpop.f32.mrf.mxu0
    %v128 = vadd.f32 0.0, %v127
    %129 = vdwg.mxu0
    %v131 = vsel %vm111, %v96, 0
    %v134 = vsel %vm111, %v100, 0
    %136 = vmatpush.bf16.xpose.msra.mxu0 0
    %137 = vmatpush.bf16.xpose.msra.mxu0 0
    %138 = vmatpush.bf16.xpose.msra.mxu0 0
    %139 = vmatpush.bf16.xpose.msra.mxu0 0
    %140 = vmatpush.bf16.xpose.msra.mxu0 0
    %141 = vmatpush.bf16.xpose.msra.mxu0 0
    %142 = vmatpush.bf16.xpose.msra.mxu0 0
    %143 = vmatpush.bf16.xpose.msra.mxu0 %v134
    %144 = vmatmul.f32.gmra.mxu0 %v131
    %v145 = vpop.f32.mrf.mxu0
    %v146 = vadd.f32 0.0, %v145
    %147 = vdwg.mxu0
    %v149 = vsel %vm111, %v97, 0
    %v152 = vsel %vm111, %v101, 0
    %154 = vmatpush.bf16.xpose.msra.mxu0 0
    %155 = vmatpush.bf16.xpose.msra.mxu0 0
    %156 = vmatpush.bf16.xpose.msra.mxu0 0
    %157 = vmatpush.bf16.xpose.msra.mxu0 0
    %158 = vmatpush.bf16.xpose.msra.mxu0 0
    %159 = vmatpush.bf16.xpose.msra.mxu0 0
    %160 = vmatpush.bf16.xpose.msra.mxu0 0
    %161 = vmatpush.bf16.xpose.msra.mxu0 %v152
    %162 = vmatmul.f32.gmra.mxu0 %v149
    %v163 = vpop.f32.mrf.mxu0
    %v164 = vadd.f32 0.0, %v163
    %165 = vdwg.mxu0
    %v167 = vsel %vm111, %v98, 0
    %v170 = vsel %vm111, %v102, 0
    %172 = vmatpush.bf16.xpose.msra.mxu0 0
    %173 = vmatpush.bf16.xpose.msra.mxu0 0
    %174 = vmatpush.bf16.xpose.msra.mxu0 0
    %175 = vmatpush.bf16.xpose.msra.mxu0 0
    %176 = vmatpush.bf16.xpose.msra.mxu0 0
    %177 = vmatpush.bf16.xpose.msra.mxu0 0
    %178 = vmatpush.bf16.xpose.msra.mxu0 0
    %179 = vmatpush.bf16.xpose.msra.mxu0 %v170
    %180 = vmatmul.f32.gmra.mxu0 %v167
    %v181 = vpop.f32.mrf.mxu0
    %v182 = vadd.f32 0.0, %v181
    %183 = vdwg.mxu0
    %vm184 = vnez %v107
    %vm185 = vnez %v108
    %vm186 = vnez %v109
    %vm187 = vnez %v110
    %v188 = vsel %vm184, 16843009, 0
    %v189 = vsel %vm185, 16843009, 0
    %v190 = vsel %vm186, 16843009, 0
    %v191 = vsel %vm187, 16843009, 0
    %v192 = vunpack.c.0.s8 %v188
    %v193 = vunpack.c.0.s8 %v189
    %v194 = vunpack.c.0.s8 %v190
    %v195 = vunpack.c.0.s8 %v191
    %vm196 = vcmp.ne.s32.totalorder %v192, 0
    %vm197 = vcmp.ne.s32.totalorder %v193, 0
    %vm198 = vcmp.ne.s32.totalorder %v194, 0
    %vm199 = vcmp.ne.s32.totalorder %v195, 0
    %v200 = vsel %vm196, -1e+09, %v128
    %v201 = vsel %vm197, -1e+09, %v146
    %v202 = vsel %vm198, -1e+09, %v164
    %v203 = vsel %vm199, -1e+09, %v182
    %vm204 = vcmask 64512
    %v205 = vsel %vm204, %v200, -inf
    %206 = vmax.xlane.f32.xlu0 %v205
    %v207 = vpop.xlane.xlu0 %206
    %v208 = vsel %vm204, %v201, -inf
    %209 = vmax.xlane.f32.xlu0 %v208
    %v210 = vpop.xlane.xlu0 %209
    %v211 = vsel %vm204, %v202, -inf
    %212 = vmax.xlane.f32.xlu0 %v211
    %v213 = vpop.xlane.xlu0 %212
    %v214 = vsel %vm204, %v203, -inf
    %215 = vmax.xlane.f32.xlu0 %v214
    %v216 = vpop.xlane.xlu0 %215
    %v217 = vsub.f32 %v200, %v207
    %v218 = vsub.f32 %v201, %v210
    %v219 = vsub.f32 %v202, %v213
    %v220 = vsub.f32 %v203, %v216
    %v221 = vmul.f32 %v217, 1.442695
    %v222 = vpow.pop %v221
    %v223 = vmul.f32 %v218, 1.442695
    %v224 = vpow.pop %v223
    %v225 = vmul.f32 %v219, 1.442695
    %v226 = vpow.pop %v225
    %v227 = vmul.f32 %v220, 1.442695
    %v228 = vpow.pop %v227
    %v229 = vsel %vm204, %v222, 0.0
    %230 = vadd.xlane.f32.xlu0 %v229
    %v231 = vpop.xlane.xlu0 %230
    %v232 = vsel %vm204, %v224, 0.0
    %233 = vadd.xlane.f32.xlu0 %v232
    %v234 = vpop.xlane.xlu0 %233
    %v235 = vsel %vm204, %v226, 0.0
    %236 = vadd.xlane.f32.xlu0 %v235
    %v237 = vpop.xlane.xlu0 %236
    %v238 = vsel %vm204, %v228, 0.0
    %239 = vadd.xlane.f32.xlu0 %v238
    %v240 = vpop.xlane.xlu0 %239
    %v241 = vrcp.pop %v231
    %v242 = vrcp.pop %v234
    %v243 = vrcp.pop %v237
    %v244 = vrcp.pop %v240
    %v245 = vmul.f32 %v222, %v241
    %v246 = vmul.f32 %v224, %v242
    %v247 = vmul.f32 %v226, %v243
    %v248 = vmul.f32 %v228, %v244
    %v249 = vpack.c.bf16 %v245, %v245
    %v250 = vpack.c.bf16 %v246, %v246
    %v251 = vpack.c.bf16 %v247, %v247
    %v252 = vpack.c.bf16 %v248, %v248
    %v254 = vsel %vm204, %v249, 0
    %vm256 = vcmask 1043456
    %v258 = vsel %vm256, %v103, 0
    %260 = vmatpush.bf16.msra.mxu0 0
    %261 = vmatpush.bf16.msra.mxu0 0
    %262 = vmatpush.bf16.msra.mxu0 0
    %263 = vmatpush.bf16.msra.mxu0 0
    %264 = vmatpush.bf16.msra.mxu0 0
    %265 = vmatpush.bf16.msra.mxu0 0
    %266 = vmatpush.bf16.msra.mxu0 0
    %267 = vmatpush.bf16.msra.mxu0 %v258
    %268 = vmatmul.bf16.gmra.mxu0 %v254
    %v269 = vpop.f32.mrf.mxu0
    %v270 = vadd.f32 0.0, %v269
    %v271 = vpop.f32.mrf.mxu0
    %272 = vdwg.mxu0
    %v274 = vsel %vm204, %v250, 0
    %v277 = vsel %vm256, %v104, 0
    %279 = vmatpush.bf16.msra.mxu0 0
    %280 = vmatpush.bf16.msra.mxu0 0
    %281 = vmatpush.bf16.msra.mxu0 0
    %282 = vmatpush.bf16.msra.mxu0 0
    %283 = vmatpush.bf16.msra.mxu0 0
    %284 = vmatpush.bf16.msra.mxu0 0
    %285 = vmatpush.bf16.msra.mxu0 0
    %286 = vmatpush.bf16.msra.mxu0 %v277
    %287 = vmatmul.bf16.gmra.mxu0 %v274
    %v288 = vpop.f32.mrf.mxu0
    %v289 = vadd.f32 0.0, %v288
    %v290 = vpop.f32.mrf.mxu0
    %291 = vdwg.mxu0
    %v293 = vsel %vm204, %v251, 0
    %v296 = vsel %vm256, %v105, 0
    %298 = vmatpush.bf16.msra.mxu0 0
    %299 = vmatpush.bf16.msra.mxu0 0
    %300 = vmatpush.bf16.msra.mxu0 0
    %301 = vmatpush.bf16.msra.mxu0 0
    %302 = vmatpush.bf16.msra.mxu0 0
    %303 = vmatpush.bf16.msra.mxu0 0
    %304 = vmatpush.bf16.msra.mxu0 0
    %305 = vmatpush.bf16.msra.mxu0 %v296
    %306 = vmatmul.bf16.gmra.mxu0 %v293
    %v307 = vpop.f32.mrf.mxu0
    %v308 = vadd.f32 0.0, %v307
    %v309 = vpop.f32.mrf.mxu0
    %310 = vdwg.mxu0
    %v312 = vsel %vm204, %v252, 0
    %v315 = vsel %vm256, %v106, 0
    %317 = vmatpush.bf16.msra.mxu0 0
    %318 = vmatpush.bf16.msra.mxu0 0
    %319 = vmatpush.bf16.msra.mxu0 0
    %320 = vmatpush.bf16.msra.mxu0 0
    %321 = vmatpush.bf16.msra.mxu0 0
    %322 = vmatpush.bf16.msra.mxu0 0
    %323 = vmatpush.bf16.msra.mxu0 0
    %324 = vmatpush.bf16.msra.mxu0 %v315
    %325 = vmatmul.bf16.gmra.mxu0 %v312
    %v326 = vpop.f32.mrf.mxu0
    %v327 = vadd.f32 0.0, %v326
    %v328 = vpop.f32.mrf.mxu0
    %329 = vdwg.mxu0
    %330 = vst.msk [vmem:[#allocation11] sm:$0xff] %vm204, %v245
    %331 = vst.msk [vmem:[#allocation11 + $0x8] sm:$0xff] %vm204, %v246
    %332 = vst.msk [vmem:[#allocation11 + $0x10] sm:$0xff] %vm204, %v247
    %333 = vst.msk [vmem:[#allocation11 + $0x18] sm:$0xff] %vm204, %v248
    %334 = vst.msk [vmem:[#allocation10] sm:$0xff] %vm111, %v270
    %335 = vst.msk [vmem:[#allocation10 + $0x8] sm:$0xff] %vm111, %v289
    %336 = vst.msk [vmem:[#allocation10 + $0x10] sm:$0xff] %vm111, %v308
    %337 = vst.msk [vmem:[#allocation10 + $0x18] sm:$0xff] %vm111, %v327
    // Predicated region
    $region34: #{tpu_custom_call.1} parent=1 // pred_check
      _
    $region35: #{tpu_custom_call.1} parent=1 // pred_check_branch
      %339 = sbr.rel (0) target = $region37
    $region36: #{tpu_custom_call.1} parent=1 // pred_region
      %341 = vsyncadd [#allocation4], 0
      %s342 = sshll.u32 [#allocation10], 4
      %s343 = int_to_ptr.vmem [resolvable:$true] %s342
      %s344 = sshll.u32 %s4, 4
      %s345 = int_to_ptr.hbm [resolvable:$true] %s344
      %350 = dma.vmem_to_hbm [thread:$0]  %s343, 512, %s345, [#allocation4], 128, 128, 8
    $region37: #{tpu_custom_call.1} parent=1 // pred_fallthru
      _
    // Predicated region
    $region38: #{tpu_custom_call.1} parent=1 // pred_check
      _
    $region39: #{tpu_custom_call.1} parent=1 // pred_check_branch
      %352 = sbr.rel (0) target = $region41
    $region40: #{tpu_custom_call.1} parent=1 // pred_region
      %354 = vsyncadd [#allocation12], 0
      %s355 = sshll.u32 [#allocation11], 4
      %s356 = int_to_ptr.vmem [resolvable:$true] %s355
      %s357 = sshll.u32 %s5, 4
      %s358 = int_to_ptr.hbm [resolvable:$true] %s357
      %363 = dma.vmem_to_hbm [thread:$0]  %s356, 512, %s358, [#allocation12], 128, 128, 8
    $region41: #{tpu_custom_call.1} parent=1 // pred_fallthru
      _
    // Predicated region
    $region42: #{tpu_custom_call.1} parent=1 // pred_check
      _
    $region43: #{tpu_custom_call.1} parent=1 // pred_check_branch
      %365 = sbr.rel (0) target = $region45
    $region44: #{tpu_custom_call.1} parent=1 // pred_region
      %367 = dma.done [#allocation4], 512
    $region45: #{tpu_custom_call.1} parent=1 // pred_fallthru
      _
    // Predicated region
    $region46: #{tpu_custom_call.1} parent=1 // pred_check
      _
    $region47: #{tpu_custom_call.1} parent=1 // pred_check_branch
      %369 = sbr.rel (0) target = $region49
    $region48: #{tpu_custom_call.1} parent=1 // pred_region
      %371 = dma.done [#allocation12], 512
    $region49: #{tpu_custom_call.1} parent=1 // pred_fallthru
      _
    %372 = vsyncpa [#allocation3], 1
    %373 = vsyncpa [#allocation6], 1
    %374 = vsyncpa [#allocation9], 1
    %375 = vsyncpa [#allocation4], 1
    %376 = vsyncpa [#allocation12], 1

</llo_original>
